<compile_context>
chip_gen: v6e
topology: v6e:2x2x1
jax: 0.10.0
libtpu: 0.0.40
codegen_flags: <defaults>
</compile_context>

<pallas_src>
import jax
import jax.numpy as jnp
from jax import lax
from jax.experimental import pallas as pl
from jax.experimental.pallas import tpu as pltpu


# ----------------------------------------------------------------------------
# Kernel: streaming row-sum of exp(p @ mem^T) + fused positive-sim mix + loss
# ----------------------------------------------------------------------------
def _mixpoint_kernel(p_ref, mem_ref, mem_a_ref, mem_b_ref, alpha_ref,
                     loss_ref, acc_ref):
    # p_ref holds the L2-normalized points already scaled by 1/t, so the
    # per-tile work is just MXU matmul + EUP exp + XLU lane-reduce.
    j = pl.program_id(0)

    @pl.when(j == 0)
    def _init():
        acc_ref[...] = jnp.zeros_like(acc_ref)

    p = p_ref[...]                                  # (B, D), resident
    m = mem_ref[...]                                # (TN, D), streamed tile
    # (B, D) . (TN, D)^T -> (B, TN)  (contract on D, no explicit transpose)
    dot = lax.dot_general(p, m, (((1,), (1,)), ((), ())),
                          preferred_element_type=jnp.float32)
    acc_ref[...] += jnp.sum(jnp.exp(dot), axis=1, keepdims=True)

    @pl.when(j == pl.num_programs(0) - 1)
    def _finalize():
        # positive sims at the two gathered bank rows (O(B*D), done once)
        pos_a = jnp.exp(jnp.sum(p * mem_a_ref[...], axis=1, keepdims=True))
        pos_b = jnp.exp(jnp.sum(p * mem_b_ref[...], axis=1, keepdims=True))
        alpha = alpha_ref[...]                      # (B, 1)
        positive = pos_a * alpha + pos_b * (1.0 - alpha)
        ratio = positive / acc_ref[...] + 1e-07     # eps placement as in torch
        loss_ref[0, 0] = -jnp.mean(jnp.log(ratio))


def mix_point_loss(points, alphas, point_indices_a, point_indices_b,
                   memory_bank, *, t, tn=None):
    B, D = points.shape
    N, D2 = memory_bank.shape
    assert D == D2

    # Lane-dense N tiles; use the full bank in one tile when it is small.
    if tn is None:
        tn = N if N <= 2048 else 2048
    assert N % tn == 0, "memory-bank size must be divisible by the N tile"

    points = points.astype(jnp.float32)
    memory_bank = memory_bank.astype(jnp.float32)

    # Hoisted out of the grid loop: exact torch l2_normalize (no eps), then
    # fold 1/t into the points so the kernel computes exp(dot) directly.
    norm_points = points / jnp.sqrt(
        jnp.sum(points * points, axis=1, keepdims=True))
    scaled_points = norm_points * (1.0 / t)

    # TODO(synk): data-dependent row gather of the positive bank rows has no
    # clean blocked Pallas expression; done with XLA indexing (B rows only).
    mem_a = memory_bank[point_indices_a]            # (B, D)
    mem_b = memory_bank[point_indices_b]            # (B, D)
    alphas2 = alphas.reshape(B, 1).astype(jnp.float32)

    loss = pl.pallas_call(
        _mixpoint_kernel,
        out_shape=jax.ShapeDtypeStruct((1, 1), jnp.float32),
        grid_spec=pltpu.PrefetchScalarGridSpec(
            num_scalar_prefetch=0,
            grid=(N // tn,),
            in_specs=[
                pl.BlockSpec((B, D), lambda j: (0, 0)),      # scaled points
                pl.BlockSpec((tn, D), lambda j: (j, 0)),     # bank tile
                pl.BlockSpec((B, D), lambda j: (0, 0)),      # bank rows at A
                pl.BlockSpec((B, D), lambda j: (0, 0)),      # bank rows at B
                pl.BlockSpec((B, 1), lambda j: (0, 0)),      # alphas
            ],
            out_specs=pl.BlockSpec((1, 1), lambda j: (0, 0),
                                   memory_space=pltpu.MemorySpace.SMEM),
            scratch_shapes=[pltpu.VMEM((B, 1), jnp.float32)]),
        compiler_params=pltpu.CompilerParams(
            dimension_semantics=("arbitrary",)),   # reduction axis
    )(scaled_points, memory_bank, mem_a, mem_b, alphas2)
    return loss[0, 0]


# ----------------------------------------------------------------------------
# Pure-JAX reference (mirrors the torch forward) for a sanity check
# ----------------------------------------------------------------------------
def _reference_loss(points, alphas, idx_a, idx_b, memory_bank, *, t):
    norm_p = points / jnp.sqrt(jnp.sum(points ** 2, axis=1, keepdims=True))
    sims = jnp.exp((norm_p @ memory_bank.T) / t)
    rows = jnp.arange(points.shape[0])
    pos_a = sims[rows, idx_a]
    pos_b = sims[rows, idx_b]
    positive = pos_a * alphas + pos_b * (1.0 - alphas)
    return -jnp.mean(jnp.log(positive / jnp.sum(sims, axis=1) + 1e-07))


# ----------------------------------------------------------------------------
if __name__ == "__main__":
    key = jax.random.PRNGKey(0)
    B, D, N = 8, 32, 256                 # batch, feature dim, memory-bank size
    t = 0.07

    k1, k2, k3, k4, k5 = jax.random.split(key, 5)
    points = jax.random.normal(k1, (B, D), jnp.float32)
    mem = jax.random.normal(k2, (N, D), jnp.float32)
    mem = mem / jnp.sqrt(jnp.sum(mem ** 2, axis=1, keepdims=True))
    idx_a = jax.random.randint(k3, (B,), 0, N, dtype=jnp.int32)
    idx_b = jax.random.randint(k4, (B,), 0, N, dtype=jnp.int32)
    alphas = jax.random.uniform(k5, (B,), jnp.float32)

    loss = mix_point_loss(points, alphas, idx_a, idx_b, mem, t=t)
    jax.block_until_ready(loss)

    ref = _reference_loss(points, alphas, idx_a, idx_b, mem, t=t)
    jax.block_until_ready(ref)
    rel = abs(float(loss) - float(ref)) / max(abs(float(ref)), 1e-6)
    assert rel < 1e-1, f"mismatch: pallas={float(loss)} ref={float(ref)}"

    print("KERNEL_OK")
</pallas_src>

<mosaic_0001>
module attributes {stable_mosaic.version = 11 : i64} {
  func.func @_mixpoint_kernel(%arg0: i32, %arg1: memref<8x32xf32, #tpu.memory_space<vmem>>, %arg2: memref<256x32xf32, #tpu.memory_space<vmem>>, %arg3: memref<8x32xf32, #tpu.memory_space<vmem>>, %arg4: memref<8x32xf32, #tpu.memory_space<vmem>>, %arg5: memref<8x1xf32, #tpu.memory_space<vmem>>, %arg6: memref<1x1xf32, #tpu.memory_space<smem>>, %arg7: memref<8x1xf32, #tpu.memory_space<vmem>>) attributes {dimension_semantics = [#tpu.dimension_semantics<arbitrary>], iteration_bounds = array<i64: 1>, scalar_prefetch = 0 : i64, scratch_operands = 1 : i64, tpu.core_type = #tpu.core_type<tc>, window_params = [{pipeline_mode = #tpu.pipeline_mode<synchronous>, transform_indices = @transform_0, window_bounds = array<i64: 8, 32>}, {transform_indices = @transform_1, window_bounds = array<i64: 256, 32>}, {pipeline_mode = #tpu.pipeline_mode<synchronous>, transform_indices = @transform_2, window_bounds = array<i64: 8, 32>}, {pipeline_mode = #tpu.pipeline_mode<synchronous>, transform_indices = @transform_3, window_bounds = array<i64: 8, 32>}, {pipeline_mode = #tpu.pipeline_mode<synchronous>, transform_indices = @transform_4, window_bounds = array<i64: 8, 1>}, {transform_indices = @transform_5, window_bounds = array<i64: 1, 1>}]} {
    %c0_i32 = arith.constant 0 : i32
    %0 = arith.cmpi eq, %arg0, %c0_i32 : i32
    %1 = arith.extui %0 : i1 to i32
    %c0_i32_0 = arith.constant 0 : i32
    %2 = arith.cmpi ne, %1, %c0_i32_0 : i32
    scf.if %2 {
      %cst_11 = arith.constant 0.000000e+00 : f32
      %15 = vector.broadcast %cst_11 : f32 to vector<8x1xf32>
      %c0_12 = arith.constant 0 : index
      %c0_13 = arith.constant 0 : index
      %16 = vector.load %arg7[%c0_12, %c0_13] : memref<8x1xf32, #tpu.memory_space<vmem>>, vector<8x1xf32>
      tpu.vector_store %arg7[%c0_12, %c0_13], %15 {strides = array<i32>} : memref<8x1xf32, #tpu.memory_space<vmem>>, vector<8x1xf32>,
    } else {
    }
    %c0 = arith.constant 0 : index
    %c0_1 = arith.constant 0 : index
    %3 = vector.load %arg1[%c0, %c0_1] : memref<8x32xf32, #tpu.memory_space<vmem>>, vector<8x32xf32>
    %c0_2 = arith.constant 0 : index
    %c0_3 = arith.constant 0 : index
    %4 = vector.load %arg2[%c0_2, %c0_3] : memref<256x32xf32, #tpu.memory_space<vmem>>, vector<256x32xf32>
    %cst = arith.constant dense<0.000000e+00> : vector<8x256xf32>
    %5 = tpu.matmul %3, %4, %cst {dimension_numbers = #tpu.dot_dimension_numbers<[1], [1], [0], [0], [0, 0, 1, 0], [], []>} : vector<8x32xf32>, vector<256x32xf32>, vector<8x256xf32> -> vector<8x256xf32>
    %c0_4 = arith.constant 0 : index
    %c0_5 = arith.constant 0 : index
    %6 = vector.load %arg7[%c0_4, %c0_5] : memref<8x1xf32, #tpu.memory_space<vmem>>, vector<8x1xf32>
    %7 = math.exp %5 : vector<8x256xf32>
    %cst_6 = arith.constant dense<0.000000e+00> : vector<8xf32>
    %8 = vector.multi_reduction <add>, %7, %cst_6 [1] : vector<8x256xf32> to vector<8xf32>
    %9 = vector.shape_cast %8 : vector<8xf32> to vector<8x1xf32>
    %10 = arith.addf %6, %9 : vector<8x1xf32>
    %c0_7 = arith.constant 0 : index
    %c0_8 = arith.constant 0 : index
    %11 = vector.load %arg7[%c0_7, %c0_8] : memref<8x1xf32, #tpu.memory_space<vmem>>, vector<8x1xf32>
    tpu.vector_store %arg7[%c0_7, %c0_8], %10 {strides = array<i32>} : memref<8x1xf32, #tpu.memory_space<vmem>>, vector<8x1xf32>,
    %c0_i32_9 = arith.constant 0 : i32
    %12 = arith.cmpi eq, %arg0, %c0_i32_9 : i32
    %13 = arith.extui %12 : i1 to i32
    %c0_i32_10 = arith.constant 0 : i32
    %14 = arith.cmpi ne, %13, %c0_i32_10 : i32
    scf.if %14 {
      %c0_11 = arith.constant 0 : index
      %c0_12 = arith.constant 0 : index
      %15 = vector.load %arg3[%c0_11, %c0_12] : memref<8x32xf32, #tpu.memory_space<vmem>>, vector<8x32xf32>
      %16 = arith.mulf %3, %15 : vector<8x32xf32>
      %cst_13 = arith.constant dense<0.000000e+00> : vector<8xf32>
      %17 = vector.multi_reduction <add>, %16, %cst_13 [1] : vector<8x32xf32> to vector<8xf32>
      %18 = vector.shape_cast %17 : vector<8xf32> to vector<8x1xf32>
      %19 = math.exp %18 : vector<8x1xf32>
      %c0_14 = arith.constant 0 : index
      %c0_15 = arith.constant 0 : index
      %20 = vector.load %arg4[%c0_14, %c0_15] : memref<8x32xf32, #tpu.memory_space<vmem>>, vector<8x32xf32>
      %21 = arith.mulf %3, %20 : vector<8x32xf32>
      %cst_16 = arith.constant dense<0.000000e+00> : vector<8xf32>
      %22 = vector.multi_reduction <add>, %21, %cst_16 [1] : vector<8x32xf32> to vector<8xf32>
      %23 = vector.shape_cast %22 : vector<8xf32> to vector<8x1xf32>
      %24 = math.exp %23 : vector<8x1xf32>
      %c0_17 = arith.constant 0 : index
      %c0_18 = arith.constant 0 : index
      %25 = vector.load %arg5[%c0_17, %c0_18] : memref<8x1xf32, #tpu.memory_space<vmem>>, vector<8x1xf32>
      %26 = arith.mulf %19, %25 : vector<8x1xf32>
      %cst_19 = arith.constant 1.000000e+00 : f32
      %27 = vector.broadcast %cst_19 : f32 to vector<8x1xf32>
      %28 = arith.subf %27, %25 : vector<8x1xf32>
      %29 = arith.mulf %24, %28 : vector<8x1xf32>
      %30 = arith.addf %26, %29 : vector<8x1xf32>
      %c0_20 = arith.constant 0 : index
      %c0_21 = arith.constant 0 : index
      %31 = vector.load %arg7[%c0_20, %c0_21] : memref<8x1xf32, #tpu.memory_space<vmem>>, vector<8x1xf32>
      %32 = arith.divf %30, %31 : vector<8x1xf32>
      %cst_22 = arith.constant 1.000000e-07 : f32
      %33 = vector.broadcast %cst_22 : f32 to vector<8x1xf32>
      %34 = arith.addf %32, %33 : vector<8x1xf32>
      %35 = math.log %34 : vector<8x1xf32>
      %36 = vector.shape_cast %35 : vector<8x1xf32> to vector<1x8x1xf32>
      %cst_23 = arith.constant dense<0.000000e+00> : vector<1xf32>
      %37 = vector.multi_reduction <add>, %36, %cst_23 [1, 2] : vector<1x8x1xf32> to vector<1xf32>
      %38 = vector.shape_cast %37 : vector<1xf32> to vector<1x1x1xf32>
      %39 = vector.extract %38[0, 0, 0] : f32 from vector<1x1x1xf32>
      %cst_24 = arith.constant 8.000000e+00 : f32
      %40 = arith.divf %39, %cst_24 : f32
      %cst_25 = arith.constant 0.000000e+00 : f32
      %41 = arith.subf %cst_25, %40 : f32
      %c0_26 = arith.constant 0 : index
      %c0_27 = arith.constant 0 : index
      %42 = memref.load %arg6[%c0_26, %c0_27] : memref<1x1xf32, #tpu.memory_space<smem>>
      memref.store %41, %arg6[%c0_26, %c0_27] : memref<1x1xf32, #tpu.memory_space<smem>>
    } else {
    }
    return
  }
  func.func @transform_0(%arg0: i32) -> (i32, i32) {
    %c0_i32 = arith.constant 0 : i32
    %c0_i32_0 = arith.constant 0 : i32
    %c0_i32_1 = arith.constant 0 : i32
    return %c0_i32, %c0_i32_0 : i32, i32
  }
  func.func @transform_1(%arg0: i32) -> (i32, i32) {
    %c0_i32 = arith.constant 0 : i32
    %c0_i32_0 = arith.constant 0 : i32
    return %arg0, %c0_i32 : i32, i32
  }
  func.func @transform_2(%arg0: i32) -> (i32, i32) {
    %c0_i32 = arith.constant 0 : i32
    %c0_i32_0 = arith.constant 0 : i32
    %c0_i32_1 = arith.constant 0 : i32
    return %c0_i32, %c0_i32_0 : i32, i32
  }
  func.func @transform_3(%arg0: i32) -> (i32, i32) {
    %c0_i32 = arith.constant 0 : i32
    %c0_i32_0 = arith.constant 0 : i32
    %c0_i32_1 = arith.constant 0 : i32
    return %c0_i32, %c0_i32_0 : i32, i32
  }
  func.func @transform_4(%arg0: i32) -> (i32, i32) {
    %c0_i32 = arith.constant 0 : i32
    %c0_i32_0 = arith.constant 0 : i32
    %c0_i32_1 = arith.constant 0 : i32
    return %c0_i32, %c0_i32_0 : i32, i32
  }
  func.func @transform_5(%arg0: i32) -> (i32, i32) {
    %c0_i32 = arith.constant 0 : i32
    %c0_i32_0 = arith.constant 0 : i32
    %c0_i32_1 = arith.constant 0 : i32
    return %c0_i32, %c0_i32_0 : i32, i32
  }
}

</mosaic_0001>

<llo_original>
// kernel: tpu_custom_call.1
$region0: #{tpu_custom_call.1}
  #allocation0 [shape = 'u32[]', space=smem, size = 0x4, offset = 0x4, fixed_abs, tag = 'smem constant byte address 0x4 - core index']
  #allocation1 [shape = 'u32[144,128]{1,0:T(1,128)}', space=vmem, size = 0x12000, scoped, tag = 'internal scratch']
  #allocation2 [shape = 'f32[8,1]{1,0:T(8,128)}', space=vmem, size = 0x1000, scoped, tag = 'scratch operand']
  %s0 = inlined_call_operand.vmem [shape: f32[8,32], index: 0, kind: input, shape index: {}]
  %s1 = inlined_call_operand.vmem [shape: f32[256,32], index: 1, kind: input, shape index: {}]
  %s2 = inlined_call_operand.vmem [shape: f32[8,32], index: 2, kind: input, shape index: {}]
  %s3 = inlined_call_operand.vmem [shape: f32[8,32], index: 3, kind: input, shape index: {}]
  %s4 = inlined_call_operand.vmem [shape: f32[8,1], index: 4, kind: input, shape index: {}]
  %s5 = inlined_call_operand.hbm [shape: f32[1,1], index: 5, kind: output, shape index: {}]
  %s6 = sld [smem:[#allocation0]]
  $region38: #{tpu_custom_call.1} parent=0
    _
  %s8 = ssub.s32 1, %s6
  %s9 = scalar_select 0, %s8, %s6
  $region1: #{tpu_custom_call.1} parent=0
    #allocation3 [shape = 'u8[512]{0}', space=smem, size = 0x200, scoped, tag = 'output window, operand 0, single buffered']
    #allocation4 [shape = 's32[1]{0}', space=sflag, size = 0x4, scoped, tag = 'scoped memory for tpu_custom_call.1']
    %10 = vsyncpa [#allocation4], 0
    // Predicated region
    $region2: #{tpu_custom_call.1} parent=1 // pred_check
      _
    $region3: #{tpu_custom_call.1} parent=1 // pred_check_branch
      %12 = sbr.rel (0) target = $region5
    $region4: #{tpu_custom_call.1} parent=1 // pred_region
      _
    $region5: #{tpu_custom_call.1} parent=1 // pred_fallthru
      _
    // Predicated region
    $region6: #{tpu_custom_call.1} parent=1 // pred_check
      _
    $region7: #{tpu_custom_call.1} parent=1 // pred_check_branch
      %14 = sbr.rel (0) target = $region9
    $region8: #{tpu_custom_call.1} parent=1 // pred_region
      _
    $region9: #{tpu_custom_call.1} parent=1 // pred_fallthru
      _
    // Predicated region
    $region10: #{tpu_custom_call.1} parent=1 // pred_check
      _
    $region11: #{tpu_custom_call.1} parent=1 // pred_check_branch
      %16 = sbr.rel (0) target = $region13
    $region12: #{tpu_custom_call.1} parent=1 // pred_region
      _
    $region13: #{tpu_custom_call.1} parent=1 // pred_fallthru
      _
    // Predicated region
    $region14: #{tpu_custom_call.1} parent=1 // pred_check
      _
    $region15: #{tpu_custom_call.1} parent=1 // pred_check_branch
      %18 = sbr.rel (0) target = $region17
    $region16: #{tpu_custom_call.1} parent=1 // pred_region
      _
    $region17: #{tpu_custom_call.1} parent=1 // pred_fallthru
      _
    // Predicated region
    $region18: #{tpu_custom_call.1} parent=1 // pred_check
      _
    $region19: #{tpu_custom_call.1} parent=1 // pred_check_branch
      %20 = sbr.rel (0) target = $region21
    $region20: #{tpu_custom_call.1} parent=1 // pred_region
      _
    $region21: #{tpu_custom_call.1} parent=1 // pred_fallthru
      _
    %p21 = scmp.eq.s32.totalorder 0, 0
    // Predicated region
    $region22: #{tpu_custom_call.1} parent=1 // pred_check
      %p22 = pneg %p21
    $region23: #{tpu_custom_call.1} parent=1 // pred_check_branch
      %24 = sbr.rel (%p22) target = $region25
    $region24: #{tpu_custom_call.1} parent=1 // pred_region
      %vm25 = vcmask 7168
      %26 = vst.msk [vmem:[#allocation2] sm:$0xff] %vm25, 0.0
    $region25: #{tpu_custom_call.1} parent=1 // pred_fallthru
      _
    %v27 = vld [vmem:[%s0] sm:$0xff]
    %v28 = vld [vmem:[%s1] sm:$0xff]
    %v29 = vld [vmem:[%s1 + $0x8] sm:$0xff]
    %v30 = vld [vmem:[%s1 + $0x10] sm:$0xff]
    %v31 = vld [vmem:[%s1 + $0x18] sm:$0xff]
    %v32 = vld [vmem:[%s1 + $0x20] sm:$0xff]
    %v33 = vld [vmem:[%s1 + $0x28] sm:$0xff]
    %v34 = vld [vmem:[%s1 + $0x30] sm:$0xff]
    %v35 = vld [vmem:[%s1 + $0x38] sm:$0xff]
    %v36 = vld [vmem:[%s1 + $0x40] sm:$0xff]
    %v37 = vld [vmem:[%s1 + $0x48] sm:$0xff]
    %v38 = vld [vmem:[%s1 + $0x50] sm:$0xff]
    %v39 = vld [vmem:[%s1 + $0x58] sm:$0xff]
    %v40 = vld [vmem:[%s1 + $0x60] sm:$0xff]
    %v41 = vld [vmem:[%s1 + $0x68] sm:$0xff]
    %v42 = vld [vmem:[%s1 + $0x70] sm:$0xff]
    %v43 = vld [vmem:[%s1 + $0x78] sm:$0xff]
    %v44 = vld [vmem:[%s1 + $0x80] sm:$0xff]
    %v45 = vld [vmem:[%s1 + $0x88] sm:$0xff]
    %v46 = vld [vmem:[%s1 + $0x90] sm:$0xff]
    %v47 = vld [vmem:[%s1 + $0x98] sm:$0xff]
    %v48 = vld [vmem:[%s1 + $0xa0] sm:$0xff]
    %v49 = vld [vmem:[%s1 + $0xa8] sm:$0xff]
    %v50 = vld [vmem:[%s1 + $0xb0] sm:$0xff]
    %v51 = vld [vmem:[%s1 + $0xb8] sm:$0xff]
    %v52 = vld [vmem:[%s1 + $0xc0] sm:$0xff]
    %v53 = vld [vmem:[%s1 + $0xc8] sm:$0xff]
    %v54 = vld [vmem:[%s1 + $0xd0] sm:$0xff]
    %v55 = vld [vmem:[%s1 + $0xd8] sm:$0xff]
    %v56 = vld [vmem:[%s1 + $0xe0] sm:$0xff]
    %v57 = vld [vmem:[%s1 + $0xe8] sm:$0xff]
    %v58 = vld [vmem:[%s1 + $0xf0] sm:$0xff]
    %v59 = vld [vmem:[%s1 + $0xf8] sm:$0xff]
    %vm60 = vcmask 261120
    %v62 = vsel %vm60, %v27, 0
    %v65 = vsel %vm60, %v28, 0
    %v68 = vsel %vm60, %v29, 0
    %v71 = vsel %vm60, %v30, 0
    %v74 = vsel %vm60, %v31, 0
    %v77 = vsel %vm60, %v32, 0
    %v80 = vsel %vm60, %v33, 0
    %v83 = vsel %vm60, %v34, 0
    %v86 = vsel %vm60, %v35, 0
    %v89 = vsel %vm60, %v36, 0
    %v92 = vsel %vm60, %v37, 0
    %v95 = vsel %vm60, %v38, 0
    %v98 = vsel %vm60, %v39, 0
    %v101 = vsel %vm60, %v40, 0
    %v104 = vsel %vm60, %v41, 0
    %v107 = vsel %vm60, %v42, 0
    %v110 = vsel %vm60, %v43, 0
    %v113 = vsel %vm60, %v44, 0
    %v116 = vsel %vm60, %v45, 0
    %v119 = vsel %vm60, %v46, 0
    %v122 = vsel %vm60, %v47, 0
    %v125 = vsel %vm60, %v48, 0
    %v128 = vsel %vm60, %v49, 0
    %v131 = vsel %vm60, %v50, 0
    %v134 = vsel %vm60, %v51, 0
    %v137 = vsel %vm60, %v52, 0
    %v140 = vsel %vm60, %v53, 0
    %v143 = vsel %vm60, %v54, 0
    %v146 = vsel %vm60, %v55, 0
    %v149 = vsel %vm60, %v56, 0
    %v152 = vsel %vm60, %v57, 0
    %v155 = vsel %vm60, %v58, 0
    %v158 = vsel %vm60, %v59, 0
    %160 = vmatprep.subr.mxu0 0.0
    %161 = vmatpush1.xpose.msra.mxu0 %v110
    %162 = vmatprep.subr.mxu0 0.0
    %163 = vmatpush1.xpose.msra.mxu0 %v107
    %164 = vmatprep.subr.mxu0 0.0
    %165 = vmatpush1.xpose.msra.mxu0 %v104
    %166 = vmatprep.subr.mxu0 0.0
    %167 = vmatpush1.xpose.msra.mxu0 %v101
    %168 = vmatprep.subr.mxu0 0.0
    %169 = vmatpush1.xpose.msra.mxu0 %v98
    %170 = vmatprep.subr.mxu0 0.0
    %171 = vmatpush1.xpose.msra.mxu0 %v95
    %172 = vmatprep.subr.mxu0 0.0
    %173 = vmatpush1.xpose.msra.mxu0 %v92
    %174 = vmatprep.subr.mxu0 0.0
    %175 = vmatpush1.xpose.msra.mxu0 %v89
    %176 = vmatprep.subr.mxu0 0.0
    %177 = vmatpush1.xpose.msra.mxu0 %v86
    %178 = vmatprep.subr.mxu0 0.0
    %179 = vmatpush1.xpose.msra.mxu0 %v83
    %180 = vmatprep.subr.mxu0 0.0
    %181 = vmatpush1.xpose.msra.mxu0 %v80
    %182 = vmatprep.subr.mxu0 0.0
    %183 = vmatpush1.xpose.msra.mxu0 %v77
    %184 = vmatprep.subr.mxu0 0.0
    %185 = vmatpush1.xpose.msra.mxu0 %v74
    %186 = vmatprep.subr.mxu0 0.0
    %187 = vmatpush1.xpose.msra.mxu0 %v71
    %188 = vmatprep.subr.mxu0 0.0
    %189 = vmatpush1.xpose.msra.mxu0 %v68
    %190 = vmatprep.subr.mxu0 0.0
    %191 = vmatpush1.xpose.msra.mxu0 %v65
    %192 = vmatprep.subr.mxu0 0.0
    %193 = vmatpush2.xpose.msra.mxu0 %v158
    %194 = vmatprep.subr.mxu0 0.0
    %195 = vmatpush2.xpose.msra.mxu0 %v155
    %196 = vmatprep.subr.mxu0 0.0
    %197 = vmatpush2.xpose.msra.mxu0 %v152
    %198 = vmatprep.subr.mxu0 0.0
    %199 = vmatpush2.xpose.msra.mxu0 %v149
    %200 = vmatprep.subr.mxu0 0.0
    %201 = vmatpush2.xpose.msra.mxu0 %v146
    %202 = vmatprep.subr.mxu0 0.0
    %203 = vmatpush2.xpose.msra.mxu0 %v143
    %204 = vmatprep.subr.mxu0 0.0
    %205 = vmatpush2.xpose.msra.mxu0 %v140
    %206 = vmatprep.subr.mxu0 0.0
    %207 = vmatpush2.xpose.msra.mxu0 %v137
    %208 = vmatprep.subr.mxu0 0.0
    %209 = vmatpush2.xpose.msra.mxu0 %v134
    %210 = vmatprep.subr.mxu0 0.0
    %211 = vmatpush2.xpose.msra.mxu0 %v131
    %212 = vmatprep.subr.mxu0 0.0
    %213 = vmatpush2.xpose.msra.mxu0 %v128
    %214 = vmatprep.subr.mxu0 0.0
    %215 = vmatpush2.xpose.msra.mxu0 %v125
    %216 = vmatprep.subr.mxu0 0.0
    %217 = vmatpush2.xpose.msra.mxu0 %v122
    %218 = vmatprep.subr.mxu0 0.0
    %219 = vmatpush2.xpose.msra.mxu0 %v119
    %220 = vmatprep.subr.mxu0 0.0
    %221 = vmatpush2.xpose.msra.mxu0 %v116
    %222 = vmatprep.subr.mxu0 0.0
    %223 = vmatpush2.xpose.msra.mxu0 %v113
    %224 = vmatprep.mubr.f32.mxu0 0.0
    %225 = vmatmul.mubr.f32.gmra.mxu0 %v62
    %v226 = vpop.f32.mrf.mxu0
    %v227 = vadd.f32 0.0, %v226
    %v228 = vpop.f32.mrf.mxu0
    %v229 = vadd.f32 0.0, %v228
    %230 = vdwg.mxu0
    %v231 = vld [vmem:[#allocation2] sm:$0xff]
    %v232 = vmul.f32 %v227, 1.442695
    %v233 = vpow.pop %v232
    %v234 = vmul.f32 %v229, 1.442695
    %v235 = vpow.pop %v234
    %v236 = vadd.f32 %v233, %v235
    %237 = vadd.xlane.f32.xlu0 %v236
    %v238 = vpop.xlane.xlu0 %237
    %v239 = vadd.f32 %v231, %v238
    %vm240 = vcmask 7168
    %241 = vst.msk [vmem:[#allocation2] sm:$0xff] %vm240, %v239
    // Predicated region
    $region26: #{tpu_custom_call.1} parent=1 // pred_check
      %p242 = pneg %p21
    $region27: #{tpu_custom_call.1} parent=1 // pred_check_branch
      %244 = sbr.rel (%p242) target = $region29
    $region28: #{tpu_custom_call.1} parent=1 // pred_region
      %v245 = vld [vmem:[%s2] sm:$0xff]
      %v246 = vmul.f32 %v27, %v245
      %v247 = vsel %vm60, %v246, 0.0
      %248 = vadd.xlane.f32.xlu0 %v247
      %v249 = vpop.xlane.xlu0 %248
      %v250 = vmul.f32 %v249, 1.442695
      %v251 = vpow.pop %v250
      %v252 = vld [vmem:[%s3] sm:$0xff]
      %v253 = vmul.f32 %v27, %v252
      %v254 = vsel %vm60, %v253, 0.0
      %255 = vadd.xlane.f32.xlu0 %v254
      %v256 = vpop.xlane.xlu0 %255
      %v257 = vmul.f32 %v256, 1.442695
      %v258 = vpow.pop %v257
      %v259 = vld [vmem:[%s4] sm:$0xff]
      %v260 = vmul.f32 %v251, %v259
      %v261 = vsub.f32 1.0, %v259
      %v262 = vmul.f32 %v258, %v261
      %v263 = vadd.f32 %v260, %v262
      %v264 = vld [vmem:[#allocation2] sm:$0xff]
      %v265 = vrcp.pop %v264
      %v266 = vmul.f32 %v263, %v265
      %v267 = vadd.f32 %v266, 1e-07
      %v268 = vlog2.pop %v267
      %v269 = vmul.f32 %v268, 0.6931472
      %v270 = vsel %vm240, %v269, 0.0
      %271 = vadd.xlane.f32.xlu0 %v270
      %v272 = vpop.xlane.xlu0 %271
      %v273 = vrot.slane %v272, 4
      %v274 = vadd.f32 %v272, %v273
      %v275 = vrot.slane %v274, 2
      %v276 = vadd.f32 %v274, %v275
      %v277 = vrot.slane %v276, 1
      %v278 = vadd.f32 %v276, %v277
      %s279 = vtos %v278
      %v280 = vrcp.pop 8.0
      %s281 = vtos %v280
      %s282 = smul.f32 %s279, %s281
      %s283 = ssub.f32 0.0, %s282
      %s284 = scalar_lea.smem [#allocation3], 0
      %285 = sst [smem:[%s284]] %s283
    $region29: #{tpu_custom_call.1} parent=1 // pred_fallthru
      _
    // Predicated region
    $region30: #{tpu_custom_call.1} parent=1 // pred_check
      _
    $region31: #{tpu_custom_call.1} parent=1 // pred_check_branch
      %287 = sbr.rel (0) target = $region33
    $region32: #{tpu_custom_call.1} parent=1 // pred_region
      %s289 = ssub.s32 16, 16
      %290 = vsyncadd [#allocation4], %s289
      %293 = dma.smem_to_hbm [#allocation3], 16, %s5, [#allocation4]
    $region33: #{tpu_custom_call.1} parent=1 // pred_fallthru
      _
    // Predicated region
    $region34: #{tpu_custom_call.1} parent=1 // pred_check
      _
    $region35: #{tpu_custom_call.1} parent=1 // pred_check_branch
      %295 = sbr.rel (0) target = $region37
    $region36: #{tpu_custom_call.1} parent=1 // pred_region
      %296 = dma.done [#allocation4], 16
    $region37: #{tpu_custom_call.1} parent=1 // pred_fallthru
      _
    %297 = sfence
    %298 = vsyncpa [#allocation4], 1

</llo_original>
